<compile_context>
chip_gen: v6e
topology: v6e:2x2x1
jax: 0.10.0
libtpu: 0.0.40
codegen_flags: <defaults>
</compile_context>

<pallas_src>
import functools

import jax
import jax.numpy as jnp
from jax.experimental import pallas as pl
from jax.experimental.pallas import tpu as pltpu


def _convblock_kernel(x_ref, w_ref, mask_ref, sel_ref, o_ref, xpf_ref, col_ref,
                      *, H, W, Cin, ks, nq, HWo, eps):
    # x_ref:    (Cin, H*W)        flat NCHW image (batch squeezed), spatial on lanes
    # w_ref:    (ct, K)           im2col weights, columns ordered (kh, kw, cin)
    # mask_ref: (1, Lc)           1.0 on valid columns (j % Wp < W), 0.0 on garbage
    # sel_ref:  (Lc, nq*HWo)      0/1 selector: quadrant q, output o -> padded column
    # o_ref:    (ct, HWo)         channels-first output, flat spatial on lanes
    # xpf_ref:  (Cin, Lp)         flat zero-padded image scratch (row stride Wp)
    # col_ref:  (K, Lc)           im2col matrix scratch
    pad = ks // 2
    Wp = W + 2 * pad
    Lc = H * Wp

    # ---- in-kernel zero padding: flat padded image (row stride Wp) ------------
    xpf_ref[...] = jnp.zeros_like(xpf_ref)
    for h in range(H):
        dst = (h + pad) * Wp + pad
        xpf_ref[:, dst:dst + W] = x_ref[:, h * W:(h + 1) * W]

    # ---- im2col: each tap is one contiguous full-lane copy (Cin rows x Lc) -----
    for kh in range(ks):
        for kw in range(ks):
            r0 = (kh * ks + kw) * Cin
            off = kh * Wp + kw
            col_ref[r0:r0 + Cin, :] = xpf_ref[:, off:off + Lc]

    # ---- Conv2d as ONE MXU matmul: (ct, K) @ (K, Lc), f32 accumulate ----------
    y = jnp.dot(w_ref[...], col_ref[...], preferred_element_type=jnp.float32)

    # ---- InstanceNorm2d(affine=False): centered two-pass over valid columns ---
    m = mask_ref[...]                                  # (1, Lc)
    inv_n = 1.0 / float(H * W)
    mean = jnp.sum(y * m, axis=1, keepdims=True) * inv_n
    d = y - mean
    var = jnp.sum(d * d * m, axis=1, keepdims=True) * inv_n   # biased, like PyTorch
    z = jnp.maximum(d * jax.lax.rsqrt(var + eps), 0.0)        # + ReLU

    # ---- MaxPool2d(2,2) + lane-dense compaction via one selection matmul ------
    # (garbage columns have zero rows in sel, so they never reach the output)
    g = jnp.dot(z, sel_ref[...], preferred_element_type=jnp.float32)  # (ct, nq*HWo)
    out = g[:, 0:HWo]
    for q in range(1, nq):
        out = jnp.maximum(out, g[:, q * HWo:(q + 1) * HWo])
    o_ref[...] = out.astype(o_ref.dtype)


def conv_block(x_nchw, w_oihw, *, ks, pool=True, eps=1e-5):
    """x_nchw: (N, Cin, H, W) float32; w_oihw: (Cout, Cin, ks, ks) float32."""
    N, Cin, H, W = x_nchw.shape
    Cout = w_oihw.shape[0]
    assert ks % 2 == 1, "padding=ks//2 only reproduces PyTorch output size for odd ks"
    pad = ks // 2
    Wp = W + 2 * pad
    Hp = H + 2 * pad
    Lc = H * Wp                       # padded flat spatial (incl. garbage columns)
    Lp = Hp * Wp + (ks - 1)           # flat padded image length (covers all tap reads)
    K = ks * ks * Cin
    Ho, Wo = (H // 2, W // 2) if pool else (H, W)
    HWo = Ho * Wo
    nq = 4 if pool else 1
    stride = 2 if pool else 1

    # Cout tiling: 128 fills the v5e MXU; exact for InstanceNorm (per-channel stats).
    ct = 128 if Cout % 128 == 0 else Cout
    n_cb = Cout // ct

    # ---- wrapper glue (all free / tiny, no HBM transpose or pad pass) ---------
    x_flat = x_nchw.reshape(N, Cin, H * W)                        # free reshape, NCHW
    w2 = jnp.transpose(w_oihw, (0, 2, 3, 1)).reshape(Cout, K)     # cols = (kh, kw, cin)

    lane = jnp.arange(Lc, dtype=jnp.int32)
    mask = ((lane % Wp) < W).astype(jnp.float32).reshape(1, Lc)

    ho = jnp.arange(Ho, dtype=jnp.int32)
    wo = jnp.arange(Wo, dtype=jnp.int32)
    sel_blocks = []
    for dh in range(stride if pool else 1):
        for dw in range(stride if pool else 1):
            p = ((stride * ho[:, None] + dh) * Wp
                 + (stride * wo[None, :] + dw)).reshape(-1)       # (HWo,)
            sel_blocks.append(jax.nn.one_hot(p, Lc, dtype=jnp.float32).T)  # (Lc, HWo)
    sel = (jnp.concatenate(sel_blocks, axis=1)
           if len(sel_blocks) > 1 else sel_blocks[0])             # (Lc, nq*HWo)

    kernel = functools.partial(_convblock_kernel, H=H, W=W, Cin=Cin, ks=ks,
                               nq=nq, HWo=HWo, eps=eps)

    # VMEM budget: scratches + double-buffered input/weight/mask/sel/output blocks.
    est = 4 * (Cin * Lp + K * Lc
               + 2 * (Cin * H * W + ct * K + ct * HWo + Lc + Lc * nq * HWo))
    vmem_limit = int(min(max(4 * est, 16 << 20), 64 << 20))

    # TODO(synk): for weight-heavy layers (Cout*K*4 > image bytes) swap grid order to
    #             (n_cb, N) so the weight block index is constant over the inner axis.
    out = pl.pallas_call(
        kernel,
        out_shape=jax.ShapeDtypeStruct((N, Cout, HWo), jnp.float32),
        grid_spec=pltpu.PrefetchScalarGridSpec(
            num_scalar_prefetch=0,
            grid=(N, n_cb),
            in_specs=[
                pl.BlockSpec((None, Cin, H * W), lambda n, j: (n, 0, 0)),
                pl.BlockSpec((ct, K), lambda n, j: (j, 0)),
                pl.BlockSpec((1, Lc), lambda n, j: (0, 0)),
                pl.BlockSpec((Lc, nq * HWo), lambda n, j: (0, 0)),
            ],
            out_specs=pl.BlockSpec((None, ct, HWo), lambda n, j: (n, j, 0)),
            scratch_shapes=[pltpu.VMEM((Cin, Lp), jnp.float32),
                            pltpu.VMEM((K, Lc), jnp.float32)],
        ),
        compiler_params=pltpu.CompilerParams(
            dimension_semantics=("parallel", "parallel"),
            vmem_limit_bytes=vmem_limit),
    )(x_flat, w2, mask, sel)

    # trailing-dim split only (free) -- output already NCHW-ordered
    return out.reshape(N, Cout, Ho, Wo)


def _reference(x_nchw, w_oihw, *, ks, pool=True, eps=1e-5):
    """Pure-JAX reference for correctness checking."""
    pad = ks // 2
    y = jax.lax.conv_general_dilated(
        x_nchw, w_oihw, window_strides=(1, 1),
        padding=[(pad, pad), (pad, pad)],
        dimension_numbers=("NCHW", "OIHW", "NCHW"))
    mean = jnp.mean(y, axis=(2, 3), keepdims=True)
    var = jnp.mean((y - mean) ** 2, axis=(2, 3), keepdims=True)
    y = (y - mean) * jax.lax.rsqrt(var + eps)
    y = jnp.maximum(y, 0.0)
    if pool:
        N, C, H, W = y.shape
        y = y[:, :, :2 * (H // 2), :2 * (W // 2)]
        y = y.reshape(N, C, H // 2, 2, W // 2, 2).max(axis=(3, 5))
    return y


if __name__ == "__main__":
    key = jax.random.PRNGKey(0)
    kx, kw = jax.random.split(key)

    N, Cin, H, W = 2, 4, 16, 16
    Cout, ks = 8, 3

    x = jax.random.normal(kx, (N, Cin, H, W), dtype=jnp.float32)
    # deterministic Conv2d weight, PyTorch shape (out_ch, in_ch, ks, ks), bias=False
    fan_in = Cin * ks * ks
    bound = 1.0 / (fan_in ** 0.5)
    w = jax.random.uniform(kw, (Cout, Cin, ks, ks), jnp.float32, -bound, bound)

    # pool=True path (matches the default ConvBlock)
    out = jax.block_until_ready(conv_block(x, w, ks=ks, pool=True))
    ref = _reference(x, w, ks=ks, pool=True)
    assert out.shape == (N, Cout, H // 2, W // 2), out.shape
    assert jnp.allclose(out, ref, atol=1e-4, rtol=1e-4), float(
        jnp.max(jnp.abs(out - ref)))

    # pool=False path
    out2 = jax.block_until_ready(conv_block(x, w, ks=ks, pool=False))
    ref2 = _reference(x, w, ks=ks, pool=False)
    assert out2.shape == (N, Cout, H, W), out2.shape
    assert jnp.allclose(out2, ref2, atol=1e-4, rtol=1e-4), float(
        jnp.max(jnp.abs(out2 - ref2)))

    print("KERNEL_OK")
</pallas_src>

<mosaic_0001>
module attributes {stable_mosaic.version = 11 : i64} {
  func.func @_convblock_kernel(%arg0: i32, %arg1: i32, %arg2: memref<1x4x256xf32, #tpu.memory_space<vmem>>, %arg3: memref<8x36xf32, #tpu.memory_space<vmem>>, %arg4: memref<1x288xf32, #tpu.memory_space<vmem>>, %arg5: memref<288x256xf32, #tpu.memory_space<vmem>>, %arg6: memref<1x8x64xf32, #tpu.memory_space<vmem>>, %arg7: memref<4x326xf32, #tpu.memory_space<vmem>>, %arg8: memref<36x288xf32, #tpu.memory_space<vmem>>) attributes {dimension_semantics = [#tpu.dimension_semantics<parallel>, #tpu.dimension_semantics<parallel>], iteration_bounds = array<i64: 2, 1>, scalar_prefetch = 0 : i64, scratch_operands = 2 : i64, tpu.core_type = #tpu.core_type<tc>, window_params = [{transform_indices = @transform_0, window_bounds = array<i64: 1, 4, 256>}, {transform_indices = @transform_1, window_bounds = array<i64: 8, 36>}, {pipeline_mode = #tpu.pipeline_mode<synchronous>, transform_indices = @transform_2, window_bounds = array<i64: 1, 288>}, {pipeline_mode = #tpu.pipeline_mode<synchronous>, transform_indices = @transform_3, window_bounds = array<i64: 288, 256>}, {transform_indices = @transform_4, window_bounds = array<i64: 1, 8, 64>}]} {
    %cst = arith.constant 0.000000e+00 : f32
    %0 = vector.broadcast %cst : f32 to vector<4x326xf32>
    %c0 = arith.constant 0 : index
    %c0_0 = arith.constant 0 : index
    %1 = vector.load %arg7[%c0, %c0_0] : memref<4x326xf32, #tpu.memory_space<vmem>>, vector<4x326xf32>
    tpu.vector_store %arg7[%c0, %c0_0], %0 {strides = array<i32>} : memref<4x326xf32, #tpu.memory_space<vmem>>, vector<4x326xf32>,
    %c0_1 = arith.constant 0 : index
    %c0_2 = arith.constant 0 : index
    %c0_3 = arith.constant 0 : index
    %2 = vector.load %arg2[%c0_1, %c0_2, %c0_3] : memref<1x4x256xf32, #tpu.memory_space<vmem>>, vector<1x4x16xf32>
    %3 = vector.shape_cast %2 : vector<1x4x16xf32> to vector<4x16xf32>
    %c0_4 = arith.constant 0 : index
    %c19 = arith.constant 19 : index
    %4 = vector.load %arg7[%c0_4, %c19] : memref<4x326xf32, #tpu.memory_space<vmem>>, vector<4x16xf32>
    tpu.vector_store %arg7[%c0_4, %c19], %3 {strides = array<i32>} : memref<4x326xf32, #tpu.memory_space<vmem>>, vector<4x16xf32>,
    %c0_5 = arith.constant 0 : index
    %c0_6 = arith.constant 0 : index
    %c16 = arith.constant 16 : index
    %5 = vector.load %arg2[%c0_5, %c0_6, %c16] : memref<1x4x256xf32, #tpu.memory_space<vmem>>, vector<1x4x16xf32>
    %6 = vector.shape_cast %5 : vector<1x4x16xf32> to vector<4x16xf32>
    %c0_7 = arith.constant 0 : index
    %c37 = arith.constant 37 : index
    %7 = vector.load %arg7[%c0_7, %c37] : memref<4x326xf32, #tpu.memory_space<vmem>>, vector<4x16xf32>
    tpu.vector_store %arg7[%c0_7, %c37], %6 {strides = array<i32>} : memref<4x326xf32, #tpu.memory_space<vmem>>, vector<4x16xf32>,
    %c0_8 = arith.constant 0 : index
    %c0_9 = arith.constant 0 : index
    %c32 = arith.constant 32 : index
    %8 = vector.load %arg2[%c0_8, %c0_9, %c32] : memref<1x4x256xf32, #tpu.memory_space<vmem>>, vector<1x4x16xf32>
    %9 = vector.shape_cast %8 : vector<1x4x16xf32> to vector<4x16xf32>
    %c0_10 = arith.constant 0 : index
    %c55 = arith.constant 55 : index
    %10 = vector.load %arg7[%c0_10, %c55] : memref<4x326xf32, #tpu.memory_space<vmem>>, vector<4x16xf32>
    tpu.vector_store %arg7[%c0_10, %c55], %9 {strides = array<i32>} : memref<4x326xf32, #tpu.memory_space<vmem>>, vector<4x16xf32>,
    %c0_11 = arith.constant 0 : index
    %c0_12 = arith.constant 0 : index
    %c48 = arith.constant 48 : index
    %11 = vector.load %arg2[%c0_11, %c0_12, %c48] : memref<1x4x256xf32, #tpu.memory_space<vmem>>, vector<1x4x16xf32>
    %12 = vector.shape_cast %11 : vector<1x4x16xf32> to vector<4x16xf32>
    %c0_13 = arith.constant 0 : index
    %c73 = arith.constant 73 : index
    %13 = vector.load %arg7[%c0_13, %c73] : memref<4x326xf32, #tpu.memory_space<vmem>>, vector<4x16xf32>
    tpu.vector_store %arg7[%c0_13, %c73], %12 {strides = array<i32>} : memref<4x326xf32, #tpu.memory_space<vmem>>, vector<4x16xf32>,
    %c0_14 = arith.constant 0 : index
    %c0_15 = arith.constant 0 : index
    %c64 = arith.constant 64 : index
    %14 = vector.load %arg2[%c0_14, %c0_15, %c64] : memref<1x4x256xf32, #tpu.memory_space<vmem>>, vector<1x4x16xf32>
    %15 = vector.shape_cast %14 : vector<1x4x16xf32> to vector<4x16xf32>
    %c0_16 = arith.constant 0 : index
    %c91 = arith.constant 91 : index
    %16 = vector.load %arg7[%c0_16, %c91] : memref<4x326xf32, #tpu.memory_space<vmem>>, vector<4x16xf32>
    tpu.vector_store %arg7[%c0_16, %c91], %15 {strides = array<i32>} : memref<4x326xf32, #tpu.memory_space<vmem>>, vector<4x16xf32>,
    %c0_17 = arith.constant 0 : index
    %c0_18 = arith.constant 0 : index
    %c80 = arith.constant 80 : index
    %17 = vector.load %arg2[%c0_17, %c0_18, %c80] : memref<1x4x256xf32, #tpu.memory_space<vmem>>, vector<1x4x16xf32>
    %18 = vector.shape_cast %17 : vector<1x4x16xf32> to vector<4x16xf32>
    %c0_19 = arith.constant 0 : index
    %c109 = arith.constant 109 : index
    %19 = vector.load %arg7[%c0_19, %c109] : memref<4x326xf32, #tpu.memory_space<vmem>>, vector<4x16xf32>
    tpu.vector_store %arg7[%c0_19, %c109], %18 {strides = array<i32>} : memref<4x326xf32, #tpu.memory_space<vmem>>, vector<4x16xf32>,
    %c0_20 = arith.constant 0 : index
    %c0_21 = arith.constant 0 : index
    %c96 = arith.constant 96 : index
    %20 = vector.load %arg2[%c0_20, %c0_21, %c96] : memref<1x4x256xf32, #tpu.memory_space<vmem>>, vector<1x4x16xf32>
    %21 = vector.shape_cast %20 : vector<1x4x16xf32> to vector<4x16xf32>
    %c0_22 = arith.constant 0 : index
    %c127 = arith.constant 127 : index
    %22 = vector.load %arg7[%c0_22, %c127] : memref<4x326xf32, #tpu.memory_space<vmem>>, vector<4x16xf32>
    tpu.vector_store %arg7[%c0_22, %c127], %21 {strides = array<i32>} : memref<4x326xf32, #tpu.memory_space<vmem>>, vector<4x16xf32>,
    %c0_23 = arith.constant 0 : index
    %c0_24 = arith.constant 0 : index
    %c112 = arith.constant 112 : index
    %23 = vector.load %arg2[%c0_23, %c0_24, %c112] : memref<1x4x256xf32, #tpu.memory_space<vmem>>, vector<1x4x16xf32>
    %24 = vector.shape_cast %23 : vector<1x4x16xf32> to vector<4x16xf32>
    %c0_25 = arith.constant 0 : index
    %c145 = arith.constant 145 : index
    %25 = vector.load %arg7[%c0_25, %c145] : memref<4x326xf32, #tpu.memory_space<vmem>>, vector<4x16xf32>
    tpu.vector_store %arg7[%c0_25, %c145], %24 {strides = array<i32>} : memref<4x326xf32, #tpu.memory_space<vmem>>, vector<4x16xf32>,
    %c0_26 = arith.constant 0 : index
    %c0_27 = arith.constant 0 : index
    %c128 = arith.constant 128 : index
    %26 = vector.load %arg2[%c0_26, %c0_27, %c128] : memref<1x4x256xf32, #tpu.memory_space<vmem>>, vector<1x4x16xf32>
    %27 = vector.shape_cast %26 : vector<1x4x16xf32> to vector<4x16xf32>
    %c0_28 = arith.constant 0 : index
    %c163 = arith.constant 163 : index
    %28 = vector.load %arg7[%c0_28, %c163] : memref<4x326xf32, #tpu.memory_space<vmem>>, vector<4x16xf32>
    tpu.vector_store %arg7[%c0_28, %c163], %27 {strides = array<i32>} : memref<4x326xf32, #tpu.memory_space<vmem>>, vector<4x16xf32>,
    %c0_29 = arith.constant 0 : index
    %c0_30 = arith.constant 0 : index
    %c144 = arith.constant 144 : index
    %29 = vector.load %arg2[%c0_29, %c0_30, %c144] : memref<1x4x256xf32, #tpu.memory_space<vmem>>, vector<1x4x16xf32>
    %30 = vector.shape_cast %29 : vector<1x4x16xf32> to vector<4x16xf32>
    %c0_31 = arith.constant 0 : index
    %c181 = arith.constant 181 : index
    %31 = vector.load %arg7[%c0_31, %c181] : memref<4x326xf32, #tpu.memory_space<vmem>>, vector<4x16xf32>
    tpu.vector_store %arg7[%c0_31, %c181], %30 {strides = array<i32>} : memref<4x326xf32, #tpu.memory_space<vmem>>, vector<4x16xf32>,
    %c0_32 = arith.constant 0 : index
    %c0_33 = arith.constant 0 : index
    %c160 = arith.constant 160 : index
    %32 = vector.load %arg2[%c0_32, %c0_33, %c160] : memref<1x4x256xf32, #tpu.memory_space<vmem>>, vector<1x4x16xf32>
    %33 = vector.shape_cast %32 : vector<1x4x16xf32> to vector<4x16xf32>
    %c0_34 = arith.constant 0 : index
    %c199 = arith.constant 199 : index
    %34 = vector.load %arg7[%c0_34, %c199] : memref<4x326xf32, #tpu.memory_space<vmem>>, vector<4x16xf32>
    tpu.vector_store %arg7[%c0_34, %c199], %33 {strides = array<i32>} : memref<4x326xf32, #tpu.memory_space<vmem>>, vector<4x16xf32>,
    %c0_35 = arith.constant 0 : index
    %c0_36 = arith.constant 0 : index
    %c176 = arith.constant 176 : index
    %35 = vector.load %arg2[%c0_35, %c0_36, %c176] : memref<1x4x256xf32, #tpu.memory_space<vmem>>, vector<1x4x16xf32>
    %36 = vector.shape_cast %35 : vector<1x4x16xf32> to vector<4x16xf32>
    %c0_37 = arith.constant 0 : index
    %c217 = arith.constant 217 : index
    %37 = vector.load %arg7[%c0_37, %c217] : memref<4x326xf32, #tpu.memory_space<vmem>>, vector<4x16xf32>
    tpu.vector_store %arg7[%c0_37, %c217], %36 {strides = array<i32>} : memref<4x326xf32, #tpu.memory_space<vmem>>, vector<4x16xf32>,
    %c0_38 = arith.constant 0 : index
    %c0_39 = arith.constant 0 : index
    %c192 = arith.constant 192 : index
    %38 = vector.load %arg2[%c0_38, %c0_39, %c192] : memref<1x4x256xf32, #tpu.memory_space<vmem>>, vector<1x4x16xf32>
    %39 = vector.shape_cast %38 : vector<1x4x16xf32> to vector<4x16xf32>
    %c0_40 = arith.constant 0 : index
    %c235 = arith.constant 235 : index
    %40 = vector.load %arg7[%c0_40, %c235] : memref<4x326xf32, #tpu.memory_space<vmem>>, vector<4x16xf32>
    tpu.vector_store %arg7[%c0_40, %c235], %39 {strides = array<i32>} : memref<4x326xf32, #tpu.memory_space<vmem>>, vector<4x16xf32>,
    %c0_41 = arith.constant 0 : index
    %c0_42 = arith.constant 0 : index
    %c208 = arith.constant 208 : index
    %41 = vector.load %arg2[%c0_41, %c0_42, %c208] : memref<1x4x256xf32, #tpu.memory_space<vmem>>, vector<1x4x16xf32>
    %42 = vector.shape_cast %41 : vector<1x4x16xf32> to vector<4x16xf32>
    %c0_43 = arith.constant 0 : index
    %c253 = arith.constant 253 : index
    %43 = vector.load %arg7[%c0_43, %c253] : memref<4x326xf32, #tpu.memory_space<vmem>>, vector<4x16xf32>
    tpu.vector_store %arg7[%c0_43, %c253], %42 {strides = array<i32>} : memref<4x326xf32, #tpu.memory_space<vmem>>, vector<4x16xf32>,
    %c0_44 = arith.constant 0 : index
    %c0_45 = arith.constant 0 : index
    %c224 = arith.constant 224 : index
    %44 = vector.load %arg2[%c0_44, %c0_45, %c224] : memref<1x4x256xf32, #tpu.memory_space<vmem>>, vector<1x4x16xf32>
    %45 = vector.shape_cast %44 : vector<1x4x16xf32> to vector<4x16xf32>
    %c0_46 = arith.constant 0 : index
    %c271 = arith.constant 271 : index
    %46 = vector.load %arg7[%c0_46, %c271] : memref<4x326xf32, #tpu.memory_space<vmem>>, vector<4x16xf32>
    tpu.vector_store %arg7[%c0_46, %c271], %45 {strides = array<i32>} : memref<4x326xf32, #tpu.memory_space<vmem>>, vector<4x16xf32>,
    %c0_47 = arith.constant 0 : index
    %c0_48 = arith.constant 0 : index
    %c240 = arith.constant 240 : index
    %47 = vector.load %arg2[%c0_47, %c0_48, %c240] : memref<1x4x256xf32, #tpu.memory_space<vmem>>, vector<1x4x16xf32>
    %48 = vector.shape_cast %47 : vector<1x4x16xf32> to vector<4x16xf32>
    %c0_49 = arith.constant 0 : index
    %c289 = arith.constant 289 : index
    %49 = vector.load %arg7[%c0_49, %c289] : memref<4x326xf32, #tpu.memory_space<vmem>>, vector<4x16xf32>
    tpu.vector_store %arg7[%c0_49, %c289], %48 {strides = array<i32>} : memref<4x326xf32, #tpu.memory_space<vmem>>, vector<4x16xf32>,
    %c0_50 = arith.constant 0 : index
    %c0_51 = arith.constant 0 : index
    %50 = vector.load %arg7[%c0_50, %c0_51] : memref<4x326xf32, #tpu.memory_space<vmem>>, vector<4x288xf32>
    %c0_52 = arith.constant 0 : index
    %c0_53 = arith.constant 0 : index
    %51 = vector.load %arg8[%c0_52, %c0_53] : memref<36x288xf32, #tpu.memory_space<vmem>>, vector<4x288xf32>
    tpu.vector_store %arg8[%c0_52, %c0_53], %50 {strides = array<i32>} : memref<36x288xf32, #tpu.memory_space<vmem>>, vector<4x288xf32>,
    %c0_54 = arith.constant 0 : index
    %c1 = arith.constant 1 : index
    %52 = vector.load %arg7[%c0_54, %c1] : memref<4x326xf32, #tpu.memory_space<vmem>>, vector<4x288xf32>
    %c4 = arith.constant 4 : index
    %c0_55 = arith.constant 0 : index
    %53 = vector.load %arg8[%c4, %c0_55] : memref<36x288xf32, #tpu.memory_space<vmem>>, vector<4x288xf32>
    tpu.vector_store %arg8[%c4, %c0_55], %52 {strides = array<i32>} : memref<36x288xf32, #tpu.memory_space<vmem>>, vector<4x288xf32>,
    %c0_56 = arith.constant 0 : index
    %c2 = arith.constant 2 : index
    %54 = vector.load %arg7[%c0_56, %c2] : memref<4x326xf32, #tpu.memory_space<vmem>>, vector<4x288xf32>
    %c8 = arith.constant 8 : index
    %c0_57 = arith.constant 0 : index
    %55 = vector.load %arg8[%c8, %c0_57] : memref<36x288xf32, #tpu.memory_space<vmem>>, vector<4x288xf32>
    tpu.vector_store %arg8[%c8, %c0_57], %54 {strides = array<i32>} : memref<36x288xf32, #tpu.memory_space<vmem>>, vector<4x288xf32>,
    %c0_58 = arith.constant 0 : index
    %c18 = arith.constant 18 : index
    %56 = vector.load %arg7[%c0_58, %c18] : memref<4x326xf32, #tpu.memory_space<vmem>>, vector<4x288xf32>
    %c12 = arith.constant 12 : index
    %c0_59 = arith.constant 0 : index
    %57 = vector.load %arg8[%c12, %c0_59] : memref<36x288xf32, #tpu.memory_space<vmem>>, vector<4x288xf32>
    tpu.vector_store %arg8[%c12, %c0_59], %56 {strides = array<i32>} : memref<36x288xf32, #tpu.memory_space<vmem>>, vector<4x288xf32>,
    %c0_60 = arith.constant 0 : index
    %c19_61 = arith.constant 19 : index
    %58 = vector.load %arg7[%c0_60, %c19_61] : memref<4x326xf32, #tpu.memory_space<vmem>>, vector<4x288xf32>
    %c16_62 = arith.constant 16 : index
    %c0_63 = arith.constant 0 : index
    %59 = vector.load %arg8[%c16_62, %c0_63] : memref<36x288xf32, #tpu.memory_space<vmem>>, vector<4x288xf32>
    tpu.vector_store %arg8[%c16_62, %c0_63], %58 {strides = array<i32>} : memref<36x288xf32, #tpu.memory_space<vmem>>, vector<4x288xf32>,
    %c0_64 = arith.constant 0 : index
    %c20 = arith.constant 20 : index
    %60 = vector.load %arg7[%c0_64, %c20] : memref<4x326xf32, #tpu.memory_space<vmem>>, vector<4x288xf32>
    %c20_65 = arith.constant 20 : index
    %c0_66 = arith.constant 0 : index
    %61 = vector.load %arg8[%c20_65, %c0_66] : memref<36x288xf32, #tpu.memory_space<vmem>>, vector<4x288xf32>
    tpu.vector_store %arg8[%c20_65, %c0_66], %60 {strides = array<i32>} : memref<36x288xf32, #tpu.memory_space<vmem>>, vector<4x288xf32>,
    %c0_67 = arith.constant 0 : index
    %c36 = arith.constant 36 : index
    %62 = vector.load %arg7[%c0_67, %c36] : memref<4x326xf32, #tpu.memory_space<vmem>>, vector<4x288xf32>
    %c24 = arith.constant 24 : index
    %c0_68 = arith.constant 0 : index
    %63 = vector.load %arg8[%c24, %c0_68] : memref<36x288xf32, #tpu.memory_space<vmem>>, vector<4x288xf32>
    tpu.vector_store %arg8[%c24, %c0_68], %62 {strides = array<i32>} : memref<36x288xf32, #tpu.memory_space<vmem>>, vector<4x288xf32>,
    %c0_69 = arith.constant 0 : index
    %c37_70 = arith.constant 37 : index
    %64 = vector.load %arg7[%c0_69, %c37_70] : memref<4x326xf32, #tpu.memory_space<vmem>>, vector<4x288xf32>
    %c28 = arith.constant 28 : index
    %c0_71 = arith.constant 0 : index
    %65 = vector.load %arg8[%c28, %c0_71] : memref<36x288xf32, #tpu.memory_space<vmem>>, vector<4x288xf32>
    tpu.vector_store %arg8[%c28, %c0_71], %64 {strides = array<i32>} : memref<36x288xf32, #tpu.memory_space<vmem>>, vector<4x288xf32>,
    %c0_72 = arith.constant 0 : index
    %c38 = arith.constant 38 : index
    %66 = vector.load %arg7[%c0_72, %c38] : memref<4x326xf32, #tpu.memory_space<vmem>>, vector<4x288xf32>
    %c32_73 = arith.constant 32 : index
    %c0_74 = arith.constant 0 : index
    %67 = vector.load %arg8[%c32_73, %c0_74] : memref<36x288xf32, #tpu.memory_space<vmem>>, vector<4x288xf32>
    tpu.vector_store %arg8[%c32_73, %c0_74], %66 {strides = array<i32>} : memref<36x288xf32, #tpu.memory_space<vmem>>, vector<4x288xf32>,
    %c0_75 = arith.constant 0 : index
    %c0_76 = arith.constant 0 : index
    %68 = vector.load %arg3[%c0_75, %c0_76] : memref<8x36xf32, #tpu.memory_space<vmem>>, vector<8x36xf32>
    %c0_77 = arith.constant 0 : index
    %c0_78 = arith.constant 0 : index
    %69 = vector.load %arg8[%c0_77, %c0_78] : memref<36x288xf32, #tpu.memory_space<vmem>>, vector<36x288xf32>
    %cst_79 = arith.constant dense<0.000000e+00> : vector<8x288xf32>
    %70 = tpu.matmul %68, %69, %cst_79 {dimension_numbers = #tpu.dot_dimension_numbers<[1], [0], [0], [1], [0, 0, 1, 1], [], []>} : vector<8x36xf32>, vector<36x288xf32>, vector<8x288xf32> -> vector<8x288xf32>
    %c0_80 = arith.constant 0 : index
    %c0_81 = arith.constant 0 : index
    %71 = vector.load %arg4[%c0_80, %c0_81] : memref<1x288xf32, #tpu.memory_space<vmem>>, vector<1x288xf32>
    %72 = vector.broadcast %71 : vector<1x288xf32> to vector<8x288xf32>
    %73 = arith.mulf %70, %72 : vector<8x288xf32>
    %cst_82 = arith.constant dense<0.000000e+00> : vector<8xf32>
    %74 = vector.multi_reduction <add>, %73, %cst_82 [1] : vector<8x288xf32> to vector<8xf32>
    %75 = vector.shape_cast %74 : vector<8xf32> to vector<8x1xf32>
    %cst_83 = arith.constant 3.906250e-03 : f32
    %76 = vector.broadcast %cst_83 : f32 to vector<8x1xf32>
    %77 = arith.mulf %75, %76 : vector<8x1xf32>
    %78 = vector.broadcast %77 : vector<8x1xf32> to vector<8x288xf32>
    %79 = arith.subf %70, %78 : vector<8x288xf32>
    %80 = arith.mulf %79, %79 : vector<8x288xf32>
    %81 = vector.broadcast %71 : vector<1x288xf32> to vector<8x288xf32>
    %82 = arith.mulf %80, %81 : vector<8x288xf32>
    %cst_84 = arith.constant dense<0.000000e+00> : vector<8xf32>
    %83 = vector.multi_reduction <add>, %82, %cst_84 [1] : vector<8x288xf32> to vector<8xf32>
    %84 = vector.shape_cast %83 : vector<8xf32> to vector<8x1xf32>
    %cst_85 = arith.constant 3.906250e-03 : f32
    %85 = vector.broadcast %cst_85 : f32 to vector<8x1xf32>
    %86 = arith.mulf %84, %85 : vector<8x1xf32>
    %cst_86 = arith.constant 9.99999974E-6 : f32
    %87 = vector.broadcast %cst_86 : f32 to vector<8x1xf32>
    %88 = arith.addf %86, %87 : vector<8x1xf32>
    %89 = math.rsqrt %88 : vector<8x1xf32>
    %90 = vector.broadcast %89 : vector<8x1xf32> to vector<8x288xf32>
    %91 = arith.mulf %79, %90 : vector<8x288xf32>
    %cst_87 = arith.constant 0.000000e+00 : f32
    %92 = vector.broadcast %cst_87 : f32 to vector<8x288xf32>
    %93 = arith.maximumf %91, %92 : vector<8x288xf32>
    %c0_88 = arith.constant 0 : index
    %c0_89 = arith.constant 0 : index
    %94 = vector.load %arg5[%c0_88, %c0_89] : memref<288x256xf32, #tpu.memory_space<vmem>>, vector<288x256xf32>
    %cst_90 = arith.constant dense<0.000000e+00> : vector<8x256xf32>
    %95 = tpu.matmul %93, %94, %cst_90 {dimension_numbers = #tpu.dot_dimension_numbers<[1], [0], [0], [1], [0, 0, 1, 1], [], []>} : vector<8x288xf32>, vector<288x256xf32>, vector<8x256xf32> -> vector<8x256xf32>
    %96 = vector.extract_strided_slice %95 {offsets = [0, 0], sizes = [8, 64], strides = [1, 1]} : vector<8x256xf32> to vector<8x64xf32>
    %97 = vector.extract_strided_slice %95 {offsets = [0, 64], sizes = [8, 64], strides = [1, 1]} : vector<8x256xf32> to vector<8x64xf32>
    %98 = arith.maximumf %96, %97 : vector<8x64xf32>
    %99 = vector.extract_strided_slice %95 {offsets = [0, 128], sizes = [8, 64], strides = [1, 1]} : vector<8x256xf32> to vector<8x64xf32>
    %100 = arith.maximumf %98, %99 : vector<8x64xf32>
    %101 = vector.extract_strided_slice %95 {offsets = [0, 192], sizes = [8, 64], strides = [1, 1]} : vector<8x256xf32> to vector<8x64xf32>
    %102 = arith.maximumf %100, %101 : vector<8x64xf32>
    %c0_91 = arith.constant 0 : index
    %c0_92 = arith.constant 0 : index
    %c0_93 = arith.constant 0 : index
    %103 = vector.load %arg6[%c0_91, %c0_92, %c0_93] : memref<1x8x64xf32, #tpu.memory_space<vmem>>, vector<1x8x64xf32>
    %104 = vector.shape_cast %103 : vector<1x8x64xf32> to vector<8x64xf32>
    %105 = vector.shape_cast %102 : vector<8x64xf32> to vector<1x8x64xf32>
    tpu.vector_store %arg6[%c0_91, %c0_92, %c0_93], %105 {strides = array<i32>} : memref<1x8x64xf32, #tpu.memory_space<vmem>>, vector<1x8x64xf32>,
    return
  }
  func.func @transform_0(%arg0: i32, %arg1: i32) -> (i32, i32, i32) {
    %c0_i32 = arith.constant 0 : i32
    %c0_i32_0 = arith.constant 0 : i32
    %c0_i32_1 = arith.constant 0 : i32
    return %arg0, %c0_i32, %c0_i32_0 : i32, i32, i32
  }
  func.func @transform_1(%arg0: i32, %arg1: i32) -> (i32, i32) {
    %c0_i32 = arith.constant 0 : i32
    %c0_i32_0 = arith.constant 0 : i32
    return %arg1, %c0_i32 : i32, i32
  }
  func.func @transform_2(%arg0: i32, %arg1: i32) -> (i32, i32) {
    %c0_i32 = arith.constant 0 : i32
    %c0_i32_0 = arith.constant 0 : i32
    %c0_i32_1 = arith.constant 0 : i32
    return %c0_i32, %c0_i32_0 : i32, i32
  }
  func.func @transform_3(%arg0: i32, %arg1: i32) -> (i32, i32) {
    %c0_i32 = arith.constant 0 : i32
    %c0_i32_0 = arith.constant 0 : i32
    %c0_i32_1 = arith.constant 0 : i32
    return %c0_i32, %c0_i32_0 : i32, i32
  }
  func.func @transform_4(%arg0: i32, %arg1: i32) -> (i32, i32, i32) {
    %c0_i32 = arith.constant 0 : i32
    %c0_i32_0 = arith.constant 0 : i32
    return %arg0, %arg1, %c0_i32 : i32, i32, i32
  }
}

</mosaic_0001>

<llo_original>
// kernel: tpu_custom_call.1
$region0: #{tpu_custom_call.1}
  #allocation0 [shape = 'u32[]', space=smem, size = 0x4, offset = 0x4, fixed_abs, tag = 'smem constant byte address 0x4 - core index']
  #allocation1 [shape = 'u32[144,128]{1,0:T(1,128)}', space=vmem, size = 0x12000, scoped, tag = 'internal scratch']
  #allocation2 [shape = 'f32[4,326]{1,0:T(4,128)}', space=vmem, size = 0x1800, scoped, tag = 'scratch operand']
  #allocation3 [shape = 'f32[36,288]{1,0:T(8,128)}', space=vmem, size = 0xf000, scoped, tag = 'scratch operand']
  %s0 = inlined_call_operand.hbm [shape: f32[2,4,256], index: 0, kind: input, shape index: {}]
  %s1 = inlined_call_operand.hbm [shape: f32[8,36], index: 1, kind: input, shape index: {}]
  %s2 = inlined_call_operand.vmem [shape: f32[1,288], index: 2, kind: input, shape index: {}]
  %s3 = inlined_call_operand.hbm [shape: f32[288,256], index: 3, kind: input, shape index: {}]
  %s4 = inlined_call_operand.hbm [shape: f32[2,8,64], index: 4, kind: output, shape index: {}]
  %s5 = sld [smem:[#allocation0]]
  $region61: #{tpu_custom_call.1} parent=0
    _
  %s7 = ssub.s32 1, %s5
  %s8 = scalar_select 0, %s7, %s5
  $region1: #{tpu_custom_call.1} parent=0
    #allocation4 [shape = 'u8[8192]{0}', space=vmem, size = 0x2000, scoped, tag = 'input window, operand 0']
    #allocation5 [shape = 's32[2]{0}', space=sflag, size = 0x8, scoped, tag = 'scoped memory for tpu_custom_call.1']
    #allocation6 [shape = 's32[2]{0}', space=sflag, size = 0x8, scoped, tag = 'scoped memory for tpu_custom_call.1']
    #allocation7 [shape = 'u8[4096]{0}', space=vmem, size = 0x1000, scoped, tag = 'input window, operand 1, single buffered']
    #allocation8 [shape = 's32[1]{0}', space=sflag, size = 0x4, scoped, tag = 'scoped memory for tpu_custom_call.1']
    #allocation9 [shape = 'u8[294912]{0}', space=vmem, size = 0x48000, scoped, tag = 'input window, operand 3, single buffered']
    #allocation10 [shape = 'u8[8192]{0}', space=vmem, size = 0x2000, scoped, tag = 'output window, operand 0']
    %9 = vsyncpa [#allocation5], 0
    %s10 = scalar_lea.sflag [#allocation5], 1
    %11 = vsyncpa %s10, 0
    %12 = vsyncpa [#allocation8], 0
    %13 = vsyncpa [#allocation6], 0
    %s14 = scalar_lea.sflag [#allocation6], 1
    %15 = vsyncpa %s14, 0
    loop: start=0, step=1, limit=4
    $region2: #{tpu_custom_call.1} parent=1 // loop_pre_header
      _
    $region3: #{tpu_custom_call.1} parent=1 // loop_header
      %s17 = sphi 0, %s21
      %p18 = scmp.ge.s32.totalorder %s17, 4
      %s24 = sphi 0, %s36
      %s25 = sphi 0, %s32
      %s26 = sphi 0, %s24
      %s27 = sphi 0, %s25
      %s28 = sphi 0, %s26
      %s29 = sphi 0, %s27
      %s39 = sphi 0, %s41
      %s42 = sphi 0, %s39
      %s43 = sphi 0, %s42
      %s59 = sphi 0, %s43
      %s65 = sphi 0, %s67
      %s68 = sphi 0, %s65
      %s69 = sphi 0, %s68
      %s85 = sphi 0, %s69
      %s89 = sphi 0, %s89
      %s91 = sphi 0, %s89
      %s92 = sphi 0, %s91
      %s106 = sphi 0, %s92
      %s110 = sphi 0, %s110
      %s112 = sphi 0, %s110
      %s113 = sphi 0, %s112
      %s127 = sphi 0, %s113
      %s135 = sphi 0, %s137
      %s138 = sphi 0, %s135
      %s139 = sphi 0, %s138
      %s155 = sphi 0, %s139
    $region4: #{tpu_custom_call.1} parent=1 // loop_header_branch
      %20 = sbr.rel (%p18) target = $region8
    $region5: #{tpu_custom_call.1} parent=1 // loop_body
      %s22 = ssub.s32 %s17, 1
      %s23 = ssub.s32 %s17, 2
      %s30 = sadd.s32 1, %s25
      %p31 = scmp.ge.s32.totalorder %s30, 1
      %s32 = scalar_select %p31, 0, %s30
      %s33 = sadd.s32 1, %s24
      %s34 = scalar_select %p31, %s33, %s24
      %p35 = scmp.ge.s32.totalorder %s34, 2
      %s36 = scalar_select %p35, 0, %s34
      %s37 = ssub.s32 %s24, %s36
      %p38 = scmp.eq.s32.totalorder %s37, 0
      %s40 = sadd.s32 %s39, 1
      %s41 = scalar_select %p38, %s39, %s40
      %p44 = pneg %p38
      %p45 = scmp.eq.s32.totalorder %s17, 1
      %p46 = por %p44, %p45
      %p47 = scmp.ne.s32.totalorder %s39, %s42
      %p48 = scmp.eq.s32.totalorder %s17, 0
      %p49 = por %p47, %p48
      %p50 = scmp.ne.s32.totalorder %s39, %s42
      %p51 = scmp.eq.s32.totalorder %s22, 1
      %p52 = por %p50, %p51
      %p53 = scmp.ne.s32.totalorder %s42, %s43
      %p54 = scmp.eq.s32.totalorder %s22, 0
      %p55 = por %p53, %p54
      %p56 = scmp.ne.s32.totalorder %s42, %s43
      %p57 = scmp.eq.s32.totalorder %s23, 1
      %p58 = por %p56, %p57
      %p60 = scmp.ne.s32.totalorder %s43, %s59
      %p61 = scmp.eq.s32.totalorder %s23, 0
      %p62 = por %p60, %p61
      %s63 = ssub.s32 %s25, %s32
      %p64 = scmp.eq.s32.totalorder %s63, 0
      %s66 = sadd.s32 %s65, 1
      %s67 = scalar_select %p64, %s65, %s66
      %p70 = pneg %p64
      %p71 = scmp.eq.s32.totalorder %s17, 1
      %p72 = por %p70, %p71
      %p73 = scmp.ne.s32.totalorder %s65, %s68
      %p74 = scmp.eq.s32.totalorder %s17, 0
      %p75 = por %p73, %p74
      %p76 = scmp.ne.s32.totalorder %s65, %s68
      %p77 = scmp.eq.s32.totalorder %s22, 1
      %p78 = por %p76, %p77
      %p79 = scmp.ne.s32.totalorder %s68, %s69
      %p80 = scmp.eq.s32.totalorder %s22, 0
      %p81 = por %p79, %p80
      %p82 = scmp.ne.s32.totalorder %s68, %s69
      %p83 = scmp.eq.s32.totalorder %s23, 1
      %p84 = por %p82, %p83
      %p86 = scmp.ne.s32.totalorder %s69, %s85
      %p87 = scmp.eq.s32.totalorder %s23, 0
      %p88 = por %p86, %p87
      %s90 = sadd.s32 %s89, 1
      %p93 = scmp.eq.s32.totalorder %s17, 1
      %p94 = scmp.ne.s32.totalorder %s89, %s91
      %p95 = scmp.eq.s32.totalorder %s17, 0
      %p96 = por %p94, %p95
      %p97 = scmp.ne.s32.totalorder %s89, %s91
      %p98 = scmp.eq.s32.totalorder %s22, 1
      %p99 = por %p97, %p98
      %p100 = scmp.ne.s32.totalorder %s91, %s92
      %p101 = scmp.eq.s32.totalorder %s22, 0
      %p102 = por %p100, %p101
      %p103 = scmp.ne.s32.totalorder %s91, %s92
      %p104 = scmp.eq.s32.totalorder %s23, 1
      %p105 = por %p103, %p104
      %p107 = scmp.ne.s32.totalorder %s92, %s106
      %p108 = scmp.eq.s32.totalorder %s23, 0
      %p109 = por %p107, %p108
      %s111 = sadd.s32 %s110, 1
      %p114 = scmp.eq.s32.totalorder %s17, 1
      %p115 = scmp.ne.s32.totalorder %s110, %s112
      %p116 = scmp.eq.s32.totalorder %s17, 0
      %p117 = por %p115, %p116
      %p118 = scmp.ne.s32.totalorder %s110, %s112
      %p119 = scmp.eq.s32.totalorder %s22, 1
      %p120 = por %p118, %p119
      %p121 = scmp.ne.s32.totalorder %s112, %s113
      %p122 = scmp.eq.s32.totalorder %s22, 0
      %p123 = por %p121, %p122
      %p124 = scmp.ne.s32.totalorder %s112, %s113
      %p125 = scmp.eq.s32.totalorder %s23, 1
      %p126 = por %p124, %p125
      %p128 = scmp.ne.s32.totalorder %s113, %s127
      %p129 = scmp.eq.s32.totalorder %s23, 0
      %p130 = por %p128, %p129
      %s131 = ssub.s32 %s24, %s36
      %s132 = ssub.s32 %s25, %s32
      %s133 = sor.u32 %s131, %s132
      %p134 = scmp.eq.s32.totalorder %s133, 0
      %s136 = sadd.s32 %s135, 1
      %s137 = scalar_select %p134, %s135, %s136
      %p140 = pneg %p134
      %p141 = scmp.eq.s32.totalorder %s17, 1
      %p142 = por %p140, %p141
      %p143 = scmp.ne.s32.totalorder %s135, %s138
      %p144 = scmp.eq.s32.totalorder %s17, 0
      %p145 = por %p143, %p144
      %p146 = scmp.ne.s32.totalorder %s135, %s138
      %p147 = scmp.eq.s32.totalorder %s22, 1
      %p148 = por %p146, %p147
      %p149 = scmp.ne.s32.totalorder %s138, %s139
      %p150 = scmp.eq.s32.totalorder %s22, 0
      %p151 = por %p149, %p150
      %p152 = scmp.ne.s32.totalorder %s138, %s139
      %p153 = scmp.eq.s32.totalorder %s23, 1
      %p154 = por %p152, %p153
      %p156 = scmp.ne.s32.totalorder %s139, %s155
      %p157 = scmp.eq.s32.totalorder %s23, 0
      %p158 = por %p156, %p157
      %p159 = scmp.le.s32.totalorder 1, %s17
      %p160 = scmp.lt.s32.totalorder %s17, 3
      %p161 = pnand %p159, %p160
      %p162 = pneg %p161
      // Predicated region
      $region9: #{tpu_custom_call.1} parent=5 // pred_check
        _
      $region10: #{tpu_custom_call.1} parent=5 // pred_check_branch
        %164 = sbr.rel (%p161) target = $region12
      $region11: #{tpu_custom_call.1} parent=5 // pred_region
        %s165 = ssub.s32 %s17, 1
        // Predicated region
        $region13: #{tpu_custom_call.1} parent=11 // pred_check
          %p166 = pneg %p81
        $region14: #{tpu_custom_call.1} parent=11 // pred_check_branch
          %168 = sbr.rel (%p166) target = $region16
        $region15: #{tpu_custom_call.1} parent=11 // pred_region
          %s170 = ssub.s32 128, 128
          %171 = vsyncadd [#allocation8], %s170
          %s172 = smul.addr %s27, 128
          %s173 = scalar_lea.hbm %s1, %s172
          %s175 = sshll.u32 [#allocation7], 4
          %s176 = int_to_ptr.vmem [resolvable:$true] %s175
          %178 = dma.hbm_to_vmem [thread:$0]  %s173, 128, %s176, [#allocation8]
        $region16: #{tpu_custom_call.1} parent=11 // pred_fallthru
          _
        // Predicated region
        $region17: #{tpu_custom_call.1} parent=11 // pred_check
          %p179 = pneg %p102
        $region18: #{tpu_custom_call.1} parent=11 // pred_check_branch
          %181 = sbr.rel (%p179) target = $region20
        $region19: #{tpu_custom_call.1} parent=11 // pred_region
          _
        $region20: #{tpu_custom_call.1} parent=11 // pred_fallthru
          _
        // Predicated region
        $region21: #{tpu_custom_call.1} parent=11 // pred_check
          %p182 = pneg %p123
        $region22: #{tpu_custom_call.1} parent=11 // pred_check_branch
          %184 = sbr.rel (%p182) target = $region24
        $region23: #{tpu_custom_call.1} parent=11 // pred_region
          %s186 = ssub.s32 9216, 9216
          %187 = vsyncadd [#allocation8], %s186
          %s188 = sshll.u32 [#allocation9], 4
          %s189 = int_to_ptr.vmem [resolvable:$true] %s188
          %194 = dma.hbm_to_vmem [thread:$0]  %s3, 9216, %s189, [#allocation8], 256, 256, 16
        $region24: #{tpu_custom_call.1} parent=11 // pred_fallthru
          _
      $region12: #{tpu_custom_call.1} parent=5 // pred_fallthru
        _
      %p195 = scmp.lt.s32.totalorder %s17, 2
      // Predicated region
      $region25: #{tpu_custom_call.1} parent=5 // pred_check
        %p196 = pneg %p195
      $region26: #{tpu_custom_call.1} parent=5 // pred_check_branch
        %198 = sbr.rel (%p196) target = $region28
      $region27: #{tpu_custom_call.1} parent=5 // pred_region
        // Predicated region
        $region29: #{tpu_custom_call.1} parent=27 // pred_check
          %p199 = pneg %p49
        $region30: #{tpu_custom_call.1} parent=27 // pred_check_branch
          %201 = sbr.rel (%p199) target = $region32
        $region31: #{tpu_custom_call.1} parent=27 // pred_region
          %s202 = sand.u32 %s39, 1
          %s203 = scalar_lea.sflag [#allocation5], %s202
          %s204 = sand.u32 %s39, 1
          %s205 = smul.addr %s204, 8
          %s206 = scalar_lea.vmem [#allocation4], %s205
          %s208 = ssub.s32 128, 128
          %209 = vsyncadd %s203, %s208
          %s210 = smul.addr %s24, 2
          %s211 = smul.addr %s210, 64
          %s212 = scalar_lea.hbm %s0, %s211
          %s214 = sshll.u32 %s206, 4
          %s215 = int_to_ptr.vmem [resolvable:$true] %s214
          %217 = dma.hbm_to_vmem [thread:$0]  %s212, 128, %s215, %s203
        $region32: #{tpu_custom_call.1} parent=27 // pred_fallthru
          _
      $region28: #{tpu_custom_call.1} parent=5 // pred_fallthru
        _
      %p218 = scmp.le.s32.totalorder 1, %s17
      %p219 = scmp.lt.s32.totalorder %s17, 3
      %p220 = pnand %p218, %p219
      %p221 = pneg %p220
      // Predicated region
      $region33: #{tpu_custom_call.1} parent=5 // pred_check
        _
      $region34: #{tpu_custom_call.1} parent=5 // pred_check_branch
        %223 = sbr.rel (%p220) target = $region36
      $region35: #{tpu_custom_call.1} parent=5 // pred_region
        %s224 = ssub.s32 %s17, 1
        %s225 = sand.u32 %s42, 1
        %s226 = scalar_lea.sflag [#allocation5], %s225
        %s227 = sand.u32 %s42, 1
        %s228 = smul.addr %s227, 8
        %s229 = scalar_lea.vmem [#allocation4], %s228
        // Predicated region
        $region37: #{tpu_custom_call.1} parent=35 // pred_check
          %p230 = pneg %p55
        $region38: #{tpu_custom_call.1} parent=35 // pred_check_branch
          %232 = sbr.rel (%p230) target = $region40
        $region39: #{tpu_custom_call.1} parent=35 // pred_region
          %233 = dma.done %s226, 128
        $region40: #{tpu_custom_call.1} parent=35 // pred_fallthru
          _
        // Predicated region
        $region41: #{tpu_custom_call.1} parent=35 // pred_check
          %p234 = pneg %p81
        $region42: #{tpu_custom_call.1} parent=35 // pred_check_branch
          %236 = sbr.rel (%p234) target = $region44
        $region43: #{tpu_custom_call.1} parent=35 // pred_region
          %237 = dma.done [#allocation8], 128
        $region44: #{tpu_custom_call.1} parent=35 // pred_fallthru
          _
        // Predicated region
        $region45: #{tpu_custom_call.1} parent=35 // pred_check
          %p238 = pneg %p123
        $region46: #{tpu_custom_call.1} parent=35 // pred_check_branch
          %240 = sbr.rel (%p238) target = $region48
        $region47: #{tpu_custom_call.1} parent=35 // pred_region
          %241 = dma.done [#allocation8], 9216
        $region48: #{tpu_custom_call.1} parent=35 // pred_fallthru
          _
        %s242 = sand.u32 %s42, 1
        %s243 = scalar_lea.sflag [#allocation5], %s242
        %s244 = sand.u32 %s42, 1
        %s245 = smul.addr %s244, 8
        %s246 = scalar_lea.vmem [#allocation4], %s245
        %p247 = pneg %p55
        %p248 = pneg %p52
        %p249 = pneg %p81
        %p250 = pneg %p78
        %p251 = pneg %p102
        %p252 = pneg %p99
        %p253 = pneg %p123
        %p254 = pneg %p120
        %p255 = pneg %p151
        %p256 = pneg %p148
        %s257 = sand.u32 %s138, 1
        %s258 = scalar_lea.sflag [#allocation6], %s257
        %s259 = sand.u32 %s138, 1
        %s260 = smul.addr %s259, 8
        %s261 = scalar_lea.vmem [#allocation10], %s260
        %262 = vst [vmem:[#allocation2] sm:$0xff] 0.0
        %vm263 = vcmask 568320
        %264 = vst.msk [vmem:[#allocation2 + $0x8] sm:$0xf] %vm263, 0.0
        %v265 = vld [vmem:[%s229] sm:$0xf]
        %267 = vrot.lane.b32.xlu0 %v265, 19
        %v268 = vpop.permute.xlu0 %267
        %vm270 = vcmask 281752
        %271 = vst.msk [vmem:[#allocation2] sm:$0xf] %vm270, %v268
        %v272 = vld [vmem:[%s229] sm:$0xf]
        %274 = vrot.lane.b32.xlu0 %v272, 21
        %v275 = vpop.permute.xlu0 %274
        %vm277 = vcmask 429352
        %278 = vst.msk [vmem:[#allocation2] sm:$0xf] %vm277, %v275
        %v279 = vld [vmem:[%s229] sm:$0xf]
        %281 = vrot.lane.b32.xlu0 %v279, 23
        %v282 = vpop.permute.xlu0 %281
        %vm284 = vcmask 576952
        %285 = vst.msk [vmem:[#allocation2] sm:$0xf] %vm284, %v282
        %v286 = vld [vmem:[%s229] sm:$0xf]
        %288 = vrot.lane.b32.xlu0 %v286, 25
        %v289 = vpop.permute.xlu0 %288
        %vm291 = vcmask 724552
        %292 = vst.msk [vmem:[#allocation2] sm:$0xf] %vm291, %v289
        %v293 = vld [vmem:[%s229] sm:$0xf]
        %295 = vrot.lane.b32.xlu0 %v293, 27
        %v296 = vpop.permute.xlu0 %295
        %vm298 = vcmask 872152
        %299 = vst.msk [vmem:[#allocation2] sm:$0xf] %vm298, %v296
        %v300 = vld [vmem:[%s229] sm:$0xf]
        %302 = vrot.lane.b32.xlu0 %v300, 29
        %v303 = vpop.permute.xlu0 %302
        %vm305 = vcmask 1019752
        %306 = vst.msk [vmem:[#allocation2] sm:$0xf] %vm305, %v303
        %v307 = vld [vmem:[%s229] sm:$0xf]
        %309 = vrot.lane.b32.xlu0 %v307, 31
        %v310 = vpop.permute.xlu0 %309
        %v311 = vrot.slane %v310, 4
        %vm312 = vcmask 252928
        %v313 = vsel %vm312, %v311, %v310
        %vm315 = vcmask 1044472
        %vm316 = vcmask 121860
        %vm317 = vmor %vm316, %vm315
        %318 = vst.msk [vmem:[#allocation2] sm:$0xff] %vm317, %v313
        %v319 = vld [vmem:[%s229] sm:$0xf]
        %321 = vrot.lane.b32.xlu0 %v319, 33
        %v322 = vpop.permute.xlu0 %321
        %vm324 = vcmask 265352
        %325 = vst.msk [vmem:[#allocation2 + $0x4] sm:$0xf] %vm324, %v322
        %v326 = vld [vmem:[%s229 + $0x4] sm:$0xf]
        %328 = vrot.lane.b32.xlu0 %v326, 35
        %v329 = vpop.permute.xlu0 %328
        %vm331 = vcmask 412952
        %332 = vst.msk [vmem:[#allocation2 + $0x4] sm:$0xf] %vm331, %v329
        %v333 = vld [vmem:[%s229 + $0x4] sm:$0xf]
        %335 = vrot.lane.b32.xlu0 %v333, 37
        %v336 = vpop.permute.xlu0 %335
        %vm338 = vcmask 560552
        %339 = vst.msk [vmem:[#allocation2 + $0x4] sm:$0xf] %vm338, %v336
        %v340 = vld [vmem:[%s229 + $0x4] sm:$0xf]
        %342 = vrot.lane.b32.xlu0 %v340, 39
        %v343 = vpop.permute.xlu0 %342
        %vm345 = vcmask 708152
        %346 = vst.msk [vmem:[#allocation2 + $0x4] sm:$0xf] %vm345, %v343
        %v347 = vld [vmem:[%s229 + $0x4] sm:$0xf]
        %349 = vrot.lane.b32.xlu0 %v347, 41
        %v350 = vpop.permute.xlu0 %349
        %vm352 = vcmask 855752
        %353 = vst.msk [vmem:[#allocation2 + $0x4] sm:$0xf] %vm352, %v350
        %v354 = vld [vmem:[%s229 + $0x4] sm:$0xf]
        %356 = vrot.lane.b32.xlu0 %v354, 43
        %v357 = vpop.permute.xlu0 %356
        %vm359 = vcmask 1003352
        %360 = vst.msk [vmem:[#allocation2 + $0x4] sm:$0xf] %vm359, %v357
        %v361 = vld [vmem:[%s229 + $0x4] sm:$0xf]
        %363 = vrot.lane.b32.xlu0 %v361, 45
        %v364 = vpop.permute.xlu0 %363
        %v365 = vrot.slane %v364, 4
        %vm366 = vcmask 367616
        %v367 = vsel %vm366, %v365, %v364
        %vm369 = vcmask 1044456
        %vm370 = vcmask 105476
        %vm371 = vmor %vm370, %vm369
        %372 = vst.msk [vmem:[#allocation2 + $0x4] sm:$0xff] %vm371, %v367
        %v373 = vld [vmem:[%s229 + $0x4] sm:$0xf]
        %375 = vrot.lane.b32.xlu0 %v373, 47
        %v376 = vpop.permute.xlu0 %375
        %vm378 = vcmask 248952
        %379 = vst.msk [vmem:[#allocation2 + $0x8] sm:$0xf] %vm378, %v376
        %v380 = vld [vmem:[%s229 + $0x4] sm:$0xf]
        %382 = vrot.lane.b32.xlu0 %v380, 49
        %v383 = vpop.permute.xlu0 %382
        %vm385 = vcmask 396552
        %386 = vst.msk [vmem:[#allocation2 + $0x8] sm:$0xf] %vm385, %v383
        %v387 = vld [vmem:[#allocation2] sm:$0xff]
        %v388 = vld [vmem:[#allocation2 + $0x8] sm:$0xf]
        %v390 = vcombine.high %v387, %v387
        %392 = vst [vmem:[#allocation3] sm:$0xf] %v387
        %393 = vst [vmem:[#allocation3 + $0x8] sm:$0xf] %v390
        %vm394 = vcmask 257024
        %395 = vst.msk [vmem:[#allocation3 + $0x10] sm:$0xf] %vm394, %v388
        %v396 = vld [vmem:[#allocation2] sm:$0xff]
        %v397 = vld [vmem:[#allocation2 + $0x8] sm:$0xf]
        %v400 = vcombine.low %v396, %v396
        %v401 = vcombine.low %v397, %v397
        %402 = vrot.lane.b32.xlu0 %v400, 127
        %v403 = vpop.permute.xlu0 %402
        %404 = vrot.lane.b32.xlu0 %v396, 127
        %v405 = vpop.permute.xlu0 %404
        %406 = vrot.lane.b32.xlu0 %v401, 127
        %v407 = vpop.permute.xlu0 %406
        %vm408 = vcmask 1039360
        %v409 = vsel %vm408, %v403, %v405
        %v410 = vsel %vm408, %v405, %v407
        %414 = vst [vmem:[#allocation3] sm:$0xf0] %v409
        %415 = vst [vmem:[#allocation3 + $0x8] sm:$0xf0] %v410
        %vm416 = vcmask 261124
        %417 = vst.msk [vmem:[#allocation3 + $0x10] sm:$0xf0] %vm416, %v407
        %v418 = vld [vmem:[#allocation2] sm:$0xff]
        %v419 = vld [vmem:[#allocation2 + $0x8] sm:$0xf]
        %v422 = vcombine.high %v418, %v418
        %423 = vrot.lane.b32.xlu0 %v418, 126
        %v424 = vpop.permute.xlu0 %423
        %425 = vrot.lane.b32.xlu0 %v422, 126
        %v426 = vpop.permute.xlu0 %425
        %427 = vrot.lane.b32.xlu0 %v419, 126
        %v428 = vpop.permute.xlu0 %427
        %vm429 = vcmask 1031168
        %v430 = vsel %vm429, %v424, %v426
        %v431 = vsel %vm429, %v426, %v428
        %435 = vst [vmem:[#allocation3 + $0x18] sm:$0xf] %v430
        %436 = vst [vmem:[#allocation3 + $0x20] sm:$0xf] %v431
        %437 = vst.msk [vmem:[#allocation3 + $0x28] sm:$0xf] %vm394, %v428
        %v438 = vld [vmem:[#allocation2] sm:$0xff]
        %v439 = vld [vmem:[#allocation2 + $0x8] sm:$0xf]
        %v442 = vcombine.low %v438, %v438
        %v443 = vcombine.low %v439, %v439
        %444 = vrot.lane.b32.xlu0 %v442, 110
        %v445 = vpop.permute.xlu0 %444
        %446 = vrot.lane.b32.xlu0 %v438, 110
        %v447 = vpop.permute.xlu0 %446
        %448 = vrot.lane.b32.xlu0 %v443, 110
        %v449 = vpop.permute.xlu0 %448
        %vm450 = vcmask 900096
        %v451 = vsel %vm450, %v445, %v447
        %v452 = vsel %vm450, %v447, %v449
        %456 = vst [vmem:[#allocation3 + $0x18] sm:$0xf0] %v451
        %457 = vst [vmem:[#allocation3 + $0x20] sm:$0xf0] %v452
        %458 = vst.msk [vmem:[#allocation3 + $0x28] sm:$0xf0] %vm416, %v449
        %v459 = vld [vmem:[#allocation2] sm:$0xff]
        %v460 = vld [vmem:[#allocation2 + $0x8] sm:$0xf]
        %v463 = vcombine.high %v459, %v459
        %464 = vrot.lane.b32.xlu0 %v459, 109
        %v465 = vpop.permute.xlu0 %464
        %466 = vrot.lane.b32.xlu0 %v463, 109
        %v467 = vpop.permute.xlu0 %466
        %468 = vrot.lane.b32.xlu0 %v460, 109
        %v469 = vpop.permute.xlu0 %468
        %vm470 = vcmask 891904
        %v471 = vsel %vm470, %v465, %v467
        %v472 = vsel %vm470, %v467, %v469
        %476 = vst [vmem:[#allocation3 + $0x30] sm:$0xf] %v471
        %477 = vst [vmem:[#allocation3 + $0x38] sm:$0xf] %v472
        %478 = vst.msk [vmem:[#allocation3 + $0x40] sm:$0xf] %vm394, %v469
        %v479 = vld [vmem:[#allocation2] sm:$0xff]
        %v480 = vld [vmem:[#allocation2 + $0x8] sm:$0xf]
        %v483 = vcombine.low %v479, %v479
        %v484 = vcombine.low %v480, %v480
        %485 = vrot.lane.b32.xlu0 %v483, 108
        %v486 = vpop.permute.xlu0 %485
        %487 = vrot.lane.b32.xlu0 %v479, 108
        %v488 = vpop.permute.xlu0 %487
        %489 = vrot.lane.b32.xlu0 %v484, 108
        %v490 = vpop.permute.xlu0 %489
        %vm491 = vcmask 883712
        %v492 = vsel %vm491, %v486, %v488
        %v493 = vsel %vm491, %v488, %v490
        %497 = vst [vmem:[#allocation3 + $0x30] sm:$0xf0] %v492
        %498 = vst [vmem:[#allocation3 + $0x38] sm:$0xf0] %v493
        %499 = vst.msk [vmem:[#allocation3 + $0x40] sm:$0xf0] %vm416, %v490
        %v500 = vld [vmem:[#allocation2] sm:$0xff]
        %v501 = vld [vmem:[#allocation2 + $0x8] sm:$0xf]
        %v504 = vcombine.high %v500, %v500
        %505 = vrot.lane.b32.xlu0 %v500, 92
        %v506 = vpop.permute.xlu0 %505
        %507 = vrot.lane.b32.xlu0 %v504, 92
        %v508 = vpop.permute.xlu0 %507
        %509 = vrot.lane.b32.xlu0 %v501, 92
        %v510 = vpop.permute.xlu0 %509
        %vm511 = vcmask 752640
        %v512 = vsel %vm511, %v506, %v508
        %v513 = vsel %vm511, %v508, %v510
        %517 = vst [vmem:[#allocation3 + $0x48] sm:$0xf] %v512
        %518 = vst [vmem:[#allocation3 + $0x50] sm:$0xf] %v513
        %519 = vst.msk [vmem:[#allocation3 + $0x58] sm:$0xf] %vm394, %v510
        %v520 = vld [vmem:[#allocation2] sm:$0xff]
        %v521 = vld [vmem:[#allocation2 + $0x8] sm:$0xf]
        %v524 = vcombine.low %v520, %v520
        %v525 = vcombine.low %v521, %v521
        %526 = vrot.lane.b32.xlu0 %v524, 91
        %v527 = vpop.permute.xlu0 %526
        %528 = vrot.lane.b32.xlu0 %v520, 91
        %v529 = vpop.permute.xlu0 %528
        %530 = vrot.lane.b32.xlu0 %v525, 91
        %v531 = vpop.permute.xlu0 %530
        %vm532 = vcmask 744448
        %v533 = vsel %vm532, %v527, %v529
        %v534 = vsel %vm532, %v529, %v531
        %538 = vst [vmem:[#allocation3 + $0x48] sm:$0xf0] %v533
        %539 = vst [vmem:[#allocation3 + $0x50] sm:$0xf0] %v534
        %540 = vst.msk [vmem:[#allocation3 + $0x58] sm:$0xf0] %vm416, %v531
        %v541 = vld [vmem:[#allocation2] sm:$0xff]
        %v542 = vld [vmem:[#allocation2 + $0x8] sm:$0xf]
        %v545 = vcombine.high %v541, %v541
        %546 = vrot.lane.b32.xlu0 %v541, 90
        %v547 = vpop.permute.xlu0 %546
        %548 = vrot.lane.b32.xlu0 %v545, 90
        %v549 = vpop.permute.xlu0 %548
        %550 = vrot.lane.b32.xlu0 %v542, 90
        %v551 = vpop.permute.xlu0 %550
        %vm552 = vcmask 736256
        %v553 = vsel %vm552, %v547, %v549
        %v554 = vsel %vm552, %v549, %v551
        %558 = vst [vmem:[#allocation3 + $0x60] sm:$0xf] %v553
        %559 = vst [vmem:[#allocation3 + $0x68] sm:$0xf] %v554
        %560 = vst.msk [vmem:[#allocation3 + $0x70] sm:$0xf] %vm394, %v551
        %v561 = vld [vmem:[#allocation7] sm:$0xff]
        %v562 = vld [vmem:[#allocation3] sm:$0xff]
        %v563 = vld [vmem:[#allocation3 + $0x8] sm:$0xff]
        %v564 = vld [vmem:[#allocation3 + $0x10] sm:$0xff]
        %v565 = vld [vmem:[#allocation3 + $0x18] sm:$0xff]
        %v566 = vld [vmem:[#allocation3 + $0x20] sm:$0xff]
        %v567 = vld [vmem:[#allocation3 + $0x28] sm:$0xff]
        %v568 = vld [vmem:[#allocation3 + $0x30] sm:$0xff]
        %v569 = vld [vmem:[#allocation3 + $0x38] sm:$0xff]
        %v570 = vld [vmem:[#allocation3 + $0x40] sm:$0xff]
        %v571 = vld [vmem:[#allocation3 + $0x48] sm:$0xff]
        %v572 = vld [vmem:[#allocation3 + $0x50] sm:$0xff]
        %v573 = vld [vmem:[#allocation3 + $0x58] sm:$0xff]
        %v574 = vld [vmem:[#allocation3 + $0x60] sm:$0xf]
        %v575 = vld [vmem:[#allocation3 + $0x68] sm:$0xf]
        %v576 = vld [vmem:[#allocation3 + $0x70] sm:$0xf]
        %vm577 = vcmask 293888
        %v579 = vsel %vm577, %v561, 0
        %vm581 = vcmask 1043456
        %v583 = vsel %vm581, %v574, 0
        %v586 = vsel %vm581, %v575, 0
        %v589 = vsel %vm581, %v576, 0
        %591 = vmatprep.subr.mxu0 0.0
        %592 = vmatpush1.msra.mxu0 0.0
        %593 = vmatprep.subr.mxu0 0.0
        %594 = vmatpush1.msra.mxu0 0.0
        %595 = vmatprep.subr.mxu0 0.0
        %596 = vmatpush1.msra.mxu0 0.0
        %597 = vmatprep.subr.mxu0 0.0
        %598 = vmatpush1.msra.mxu0 0.0
        %599 = vmatprep.subr.mxu0 0.0
        %600 = vmatpush1.msra.mxu0 0.0
        %601 = vmatprep.subr.mxu0 0.0
        %602 = vmatpush1.msra.mxu0 0.0
        %603 = vmatprep.subr.mxu0 0.0
        %604 = vmatpush1.msra.mxu0 0.0
        %605 = vmatprep.subr.mxu0 0.0
        %606 = vmatpush1.msra.mxu0 0.0
        %607 = vmatprep.subr.mxu0 0.0
        %608 = vmatpush1.msra.mxu0 0.0
        %609 = vmatprep.subr.mxu0 0.0
        %610 = vmatpush1.msra.mxu0 0.0
        %611 = vmatprep.subr.mxu0 0.0
        %612 = vmatpush1.msra.mxu0 0.0
        %613 = vmatprep.subr.mxu0 %v586
        %614 = vmatpush1.msra.mxu0 %v583
        %615 = vmatprep.subr.mxu0 %v572
        %616 = vmatpush1.msra.mxu0 %v571
        %617 = vmatprep.subr.mxu0 %v569
        %618 = vmatpush1.msra.mxu0 %v568
        %619 = vmatprep.subr.mxu0 %v566
        %620 = vmatpush1.msra.mxu0 %v565
        %621 = vmatprep.subr.mxu0 %v563
        %622 = vmatpush1.msra.mxu0 %v562
        %623 = vmatprep.subr.mxu0 0.0
        %624 = vmatpush2.msra.mxu0 0.0
        %625 = vmatprep.subr.mxu0 0.0
        %626 = vmatpush2.msra.mxu0 0.0
        %627 = vmatprep.subr.mxu0 0.0
        %628 = vmatpush2.msra.mxu0 0.0
        %629 = vmatprep.subr.mxu0 0.0
        %630 = vmatpush2.msra.mxu0 0.0
        %631 = vmatprep.subr.mxu0 0.0
        %632 = vmatpush2.msra.mxu0 0.0
        %633 = vmatprep.subr.mxu0 0.0
        %634 = vmatpush2.msra.mxu0 0.0
        %635 = vmatprep.subr.mxu0 0.0
        %636 = vmatpush2.msra.mxu0 0.0
        %637 = vmatprep.subr.mxu0 0.0
        %638 = vmatpush2.msra.mxu0 0.0
        %639 = vmatprep.subr.mxu0 0.0
        %640 = vmatpush2.msra.mxu0 0.0
        %641 = vmatprep.subr.mxu0 0.0
        %642 = vmatpush2.msra.mxu0 0.0
        %643 = vmatprep.subr.mxu0 0.0
        %644 = vmatpush2.msra.mxu0 0.0
        %645 = vmatprep.subr.mxu0 0.0
        %646 = vmatpush2.msra.mxu0 0.0
        %647 = vmatprep.subr.mxu0 0.0
        %648 = vmatpush2.msra.mxu0 0.0
        %649 = vmatprep.subr.mxu0 0.0
        %650 = vmatpush2.msra.mxu0 0.0
        %651 = vmatprep.subr.mxu0 0.0
        %652 = vmatpush2.msra.mxu0 0.0
        %653 = vmatprep.subr.mxu0 0.0
        %654 = vmatpush2.msra.mxu0 0.0
        %655 = vmatprep.mubr.f32.mxu0 0.0
        %656 = vmatmul.mubr.f32.gmra.mxu0 %v579
        %v657 = vpop.f32.mrf.mxu0
        %v658 = vadd.f32 0.0, %v657
        %v659 = vpop.f32.mrf.mxu0
        %v660 = vadd.f32 0.0, %v659
        %661 = vdwg.mxu0
        %662 = vmatprep.subr.mxu0 0.0
        %663 = vmatpush1.msra.mxu0 0.0
        %664 = vmatprep.subr.mxu0 0.0
        %665 = vmatpush1.msra.mxu0 0.0
        %666 = vmatprep.subr.mxu0 0.0
        %667 = vmatpush1.msra.mxu0 0.0
        %668 = vmatprep.subr.mxu0 0.0
        %669 = vmatpush1.msra.mxu0 0.0
        %670 = vmatprep.subr.mxu0 0.0
        %671 = vmatpush1.msra.mxu0 0.0
        %672 = vmatprep.subr.mxu0 0.0
        %673 = vmatpush1.msra.mxu0 0.0
        %674 = vmatprep.subr.mxu0 0.0
        %675 = vmatpush1.msra.mxu0 0.0
        %676 = vmatprep.subr.mxu0 0.0
        %677 = vmatpush1.msra.mxu0 0.0
        %678 = vmatprep.subr.mxu0 0.0
        %679 = vmatpush1.msra.mxu0 0.0
        %680 = vmatprep.subr.mxu0 0.0
        %681 = vmatpush1.msra.mxu0 0.0
        %682 = vmatprep.subr.mxu0 0.0
        %683 = vmatpush1.msra.mxu0 0.0
        %684 = vmatprep.subr.mxu0 0.0
        %685 = vmatpush1.msra.mxu0 %v589
        %686 = vmatprep.subr.mxu0 0.0
        %687 = vmatpush1.msra.mxu0 %v573
        %688 = vmatprep.subr.mxu0 0.0
        %689 = vmatpush1.msra.mxu0 %v570
        %690 = vmatprep.subr.mxu0 0.0
        %691 = vmatpush1.msra.mxu0 %v567
        %692 = vmatprep.subr.mxu0 0.0
        %693 = vmatpush1.msra.mxu0 %v564
        %694 = vmatprep.subr.mxu0 0.0
        %695 = vmatpush2.msra.mxu0 0.0
        %696 = vmatprep.subr.mxu0 0.0
        %697 = vmatpush2.msra.mxu0 0.0
        %698 = vmatprep.subr.mxu0 0.0
        %699 = vmatpush2.msra.mxu0 0.0
        %700 = vmatprep.subr.mxu0 0.0
        %701 = vmatpush2.msra.mxu0 0.0
        %702 = vmatprep.subr.mxu0 0.0
        %703 = vmatpush2.msra.mxu0 0.0
        %704 = vmatprep.subr.mxu0 0.0
        %705 = vmatpush2.msra.mxu0 0.0
        %706 = vmatprep.subr.mxu0 0.0
        %707 = vmatpush2.msra.mxu0 0.0
        %708 = vmatprep.subr.mxu0 0.0
        %709 = vmatpush2.msra.mxu0 0.0
        %710 = vmatprep.subr.mxu0 0.0
        %711 = vmatpush2.msra.mxu0 0.0
        %712 = vmatprep.subr.mxu0 0.0
        %713 = vmatpush2.msra.mxu0 0.0
        %714 = vmatprep.subr.mxu0 0.0
        %715 = vmatpush2.msra.mxu0 0.0
        %716 = vmatprep.subr.mxu0 0.0
        %717 = vmatpush2.msra.mxu0 0.0
        %718 = vmatprep.subr.mxu0 0.0
        %719 = vmatpush2.msra.mxu0 0.0
        %720 = vmatprep.subr.mxu0 0.0
        %721 = vmatpush2.msra.mxu0 0.0
        %722 = vmatprep.subr.mxu0 0.0
        %723 = vmatpush2.msra.mxu0 0.0
        %724 = vmatprep.subr.mxu0 0.0
        %725 = vmatpush2.msra.mxu0 0.0
        %726 = vmatprep.mubr.f32.mxu0 0.0
        %727 = vmatmul.mubr.f32.gmra.mxu0 %v579
        %v728 = vpop.f32.mrf.mxu0
        %v729 = vadd.f32 0.0, %v728
        %v730 = vpop.f32.mrf.mxu0
        %731 = vdwg.mxu0
        %v732 = vld [vmem:[%s2] sm:$0x7]
        %v734 = vlaneseq
        %v735 = vshrl.u32 %v734, 7
        %v736 = vsub.s32 0, %v735
        %v737 = vrot.slane %v732, %v736
        %v738 = vlaneseq
        %v739 = vshrl.u32 %v738, 7
        %v740 = vsub.s32 1, %v739
        %v741 = vrot.slane %v732, %v740
        %v742 = vlaneseq
        %v743 = vshrl.u32 %v742, 7
        %v744 = vsub.s32 2, %v743
        %v745 = vrot.slane %v732, %v744
        %v749 = vmul.f32 %v658, %v737
        %v750 = vmul.f32 %v660, %v741
        %v751 = vmul.f32 %v729, %v745
        %v752 = vadd.f32 %v749, %v750
        %vm753 = vcmask 261120
        %v754 = vsel %vm753, %v751, 0.0
        %v755 = vadd.f32 %v752, %v754
        %756 = vadd.xlane.f32.xlu0 %v755
        %v757 = vpop.xlane.xlu0 %756
        %v758 = vmul.f32 %v757, 0.00390625
        %v759 = vsub.f32 %v658, %v758
        %v760 = vsub.f32 %v660, %v758
        %v761 = vsub.f32 %v729, %v758
        %v762 = vmul.f32 %v759, %v759
        %v763 = vmul.f32 %v760, %v760
        %v764 = vmul.f32 %v761, %v761
        %v765 = vmul.f32 %v762, %v737
        %v766 = vmul.f32 %v763, %v741
        %v767 = vmul.f32 %v764, %v745
        %v768 = vadd.f32 %v765, %v766
        %v769 = vsel %vm753, %v767, 0.0
        %v770 = vadd.f32 %v768, %v769
        %771 = vadd.xlane.f32.xlu0 %v770
        %v772 = vpop.xlane.xlu0 %771
        %v773 = vmul.f32 %v772, 0.00390625
        %v774 = vadd.f32 %v773, 1e-05
        %v775 = vrsqrt.pop %v774
        %v776 = vmul.f32 %v759, %v775
        %v777 = vmul.f32 %v760, %v775
        %v778 = vmul.f32 %v761, %v775
        %v779 = vmax.f32 %v776, 0.0
        %v780 = vmax.f32 %v777, 0.0
        %v781 = vmax.f32 %v778, 0.0
        %v782 = vld [vmem:[#allocation9] sm:$0xff]
        %v783 = vld [vmem:[#allocation9 + $0x8] sm:$0xff]
        %v784 = vld [vmem:[#allocation9 + $0x10] sm:$0xff]
        %v785 = vld [vmem:[#allocation9 + $0x18] sm:$0xff]
        %v786 = vld [vmem:[#allocation9 + $0x20] sm:$0xff]
        %v787 = vld [vmem:[#allocation9 + $0x28] sm:$0xff]
        %v788 = vld [vmem:[#allocation9 + $0x30] sm:$0xff]
        %v789 = vld [vmem:[#allocation9 + $0x38] sm:$0xff]
        %v790 = vld [vmem:[#allocation9 + $0x40] sm:$0xff]
        %v791 = vld [vmem:[#allocation9 + $0x48] sm:$0xff]
        %v792 = vld [vmem:[#allocation9 + $0x50] sm:$0xff]
        %v793 = vld [vmem:[#allocation9 + $0x58] sm:$0xff]
        %v794 = vld [vmem:[#allocation9 + $0x60] sm:$0xff]
        %v795 = vld [vmem:[#allocation9 + $0x68] sm:$0xff]
        %v796 = vld [vmem:[#allocation9 + $0x70] sm:$0xff]
        %v797 = vld [vmem:[#allocation9 + $0x78] sm:$0xff]
        %v798 = vld [vmem:[#allocation9 + $0x80] sm:$0xff]
        %v799 = vld [vmem:[#allocation9 + $0x88] sm:$0xff]
        %v800 = vld [vmem:[#allocation9 + $0x90] sm:$0xff]
        %v801 = vld [vmem:[#allocation9 + $0x98] sm:$0xff]
        %v802 = vld [vmem:[#allocation9 + $0xa0] sm:$0xff]
        %v803 = vld [vmem:[#allocation9 + $0xa8] sm:$0xff]
        %v804 = vld [vmem:[#allocation9 + $0xb0] sm:$0xff]
        %v805 = vld [vmem:[#allocation9 + $0xb8] sm:$0xff]
        %v806 = vld [vmem:[#allocation9 + $0xc0] sm:$0xff]
        %v807 = vld [vmem:[#allocation9 + $0xc8] sm:$0xff]
        %v808 = vld [vmem:[#allocation9 + $0xd0] sm:$0xff]
        %v809 = vld [vmem:[#allocation9 + $0xd8] sm:$0xff]
        %v810 = vld [vmem:[#allocation9 + $0xe0] sm:$0xff]
        %v811 = vld [vmem:[#allocation9 + $0xe8] sm:$0xff]
        %v812 = vld [vmem:[#allocation9 + $0xf0] sm:$0xff]
        %v813 = vld [vmem:[#allocation9 + $0xf8] sm:$0xff]
        %v814 = vld [vmem:[#allocation9 + $0x100] sm:$0xff]
        %v815 = vld [vmem:[#allocation9 + $0x108] sm:$0xff]
        %v816 = vld [vmem:[#allocation9 + $0x110] sm:$0xff]
        %v817 = vld [vmem:[#allocation9 + $0x118] sm:$0xff]
        %v818 = vld [vmem:[#allocation9 + $0x120] sm:$0xff]
        %v819 = vld [vmem:[#allocation9 + $0x128] sm:$0xff]
        %v820 = vld [vmem:[#allocation9 + $0x130] sm:$0xff]
        %v821 = vld [vmem:[#allocation9 + $0x138] sm:$0xff]
        %v822 = vld [vmem:[#allocation9 + $0x140] sm:$0xff]
        %v823 = vld [vmem:[#allocation9 + $0x148] sm:$0xff]
        %v824 = vld [vmem:[#allocation9 + $0x150] sm:$0xff]
        %v825 = vld [vmem:[#allocation9 + $0x158] sm:$0xff]
        %v826 = vld [vmem:[#allocation9 + $0x160] sm:$0xff]
        %v827 = vld [vmem:[#allocation9 + $0x168] sm:$0xff]
        %v828 = vld [vmem:[#allocation9 + $0x170] sm:$0xff]
        %v829 = vld [vmem:[#allocation9 + $0x178] sm:$0xff]
        %v830 = vld [vmem:[#allocation9 + $0x180] sm:$0xff]
        %v831 = vld [vmem:[#allocation9 + $0x188] sm:$0xff]
        %v832 = vld [vmem:[#allocation9 + $0x190] sm:$0xff]
        %v833 = vld [vmem:[#allocation9 + $0x198] sm:$0xff]
        %v834 = vld [vmem:[#allocation9 + $0x1a0] sm:$0xff]
        %v835 = vld [vmem:[#allocation9 + $0x1a8] sm:$0xff]
        %v836 = vld [vmem:[#allocation9 + $0x1b0] sm:$0xff]
        %v837 = vld [vmem:[#allocation9 + $0x1b8] sm:$0xff]
        %v838 = vld [vmem:[#allocation9 + $0x1c0] sm:$0xff]
        %v839 = vld [vmem:[#allocation9 + $0x1c8] sm:$0xff]
        %v840 = vld [vmem:[#allocation9 + $0x1d0] sm:$0xff]
        %v841 = vld [vmem:[#allocation9 + $0x1d8] sm:$0xff]
        %v842 = vld [vmem:[#allocation9 + $0x1e0] sm:$0xff]
        %v843 = vld [vmem:[#allocation9 + $0x1e8] sm:$0xff]
        %v844 = vld [vmem:[#allocation9 + $0x1f0] sm:$0xff]
        %v845 = vld [vmem:[#allocation9 + $0x1f8] sm:$0xff]
        %v846 = vld [vmem:[#allocation9 + $0x200] sm:$0xff]
        %v847 = vld [vmem:[#allocation9 + $0x208] sm:$0xff]
        %v848 = vld [vmem:[#allocation9 + $0x210] sm:$0xff]
        %v849 = vld [vmem:[#allocation9 + $0x218] sm:$0xff]
        %v850 = vld [vmem:[#allocation9 + $0x220] sm:$0xff]
        %v851 = vld [vmem:[#allocation9 + $0x228] sm:$0xff]
        %v852 = vld [vmem:[#allocation9 + $0x230] sm:$0xff]
        %v853 = vld [vmem:[#allocation9 + $0x238] sm:$0xff]
        %v855 = vsel %vm753, %v781, 0
        %857 = vmatprep.subr.mxu0 %v813
        %858 = vmatpush1.msra.mxu0 %v812
        %859 = vmatprep.subr.mxu0 %v811
        %860 = vmatpush1.msra.mxu0 %v810
        %861 = vmatprep.subr.mxu0 %v809
        %862 = vmatpush1.msra.mxu0 %v808
        %863 = vmatprep.subr.mxu0 %v807
        %864 = vmatpush1.msra.mxu0 %v806
        %865 = vmatprep.subr.mxu0 %v805
        %866 = vmatpush1.msra.mxu0 %v804
        %867 = vmatprep.subr.mxu0 %v803
        %868 = vmatpush1.msra.mxu0 %v802
        %869 = vmatprep.subr.mxu0 %v801
        %870 = vmatpush1.msra.mxu0 %v800
        %871 = vmatprep.subr.mxu0 %v799
        %872 = vmatpush1.msra.mxu0 %v798
        %873 = vmatprep.subr.mxu0 %v797
        %874 = vmatpush1.msra.mxu0 %v796
        %875 = vmatprep.subr.mxu0 %v795
        %876 = vmatpush1.msra.mxu0 %v794
        %877 = vmatprep.subr.mxu0 %v793
        %878 = vmatpush1.msra.mxu0 %v792
        %879 = vmatprep.subr.mxu0 %v791
        %880 = vmatpush1.msra.mxu0 %v790
        %881 = vmatprep.subr.mxu0 %v789
        %882 = vmatpush1.msra.mxu0 %v788
        %883 = vmatprep.subr.mxu0 %v787
        %884 = vmatpush1.msra.mxu0 %v786
        %885 = vmatprep.subr.mxu0 %v785
        %886 = vmatpush1.msra.mxu0 %v784
        %887 = vmatprep.subr.mxu0 %v783
        %888 = vmatpush1.msra.mxu0 %v782
        %889 = vmatprep.subr.mxu0 %v845
        %890 = vmatpush2.msra.mxu0 %v844
        %891 = vmatprep.subr.mxu0 %v843
        %892 = vmatpush2.msra.mxu0 %v842
        %893 = vmatprep.subr.mxu0 %v841
        %894 = vmatpush2.msra.mxu0 %v840
        %895 = vmatprep.subr.mxu0 %v839
        %896 = vmatpush2.msra.mxu0 %v838
        %897 = vmatprep.subr.mxu0 %v837
        %898 = vmatpush2.msra.mxu0 %v836
        %899 = vmatprep.subr.mxu0 %v835
        %900 = vmatpush2.msra.mxu0 %v834
        %901 = vmatprep.subr.mxu0 %v833
        %902 = vmatpush2.msra.mxu0 %v832
        %903 = vmatprep.subr.mxu0 %v831
        %904 = vmatpush2.msra.mxu0 %v830
        %905 = vmatprep.subr.mxu0 %v829
        %906 = vmatpush2.msra.mxu0 %v828
        %907 = vmatprep.subr.mxu0 %v827
        %908 = vmatpush2.msra.mxu0 %v826
        %909 = vmatprep.subr.mxu0 %v825
        %910 = vmatpush2.msra.mxu0 %v824
        %911 = vmatprep.subr.mxu0 %v823
        %912 = vmatpush2.msra.mxu0 %v822
        %913 = vmatprep.subr.mxu0 %v821
        %914 = vmatpush2.msra.mxu0 %v820
        %915 = vmatprep.subr.mxu0 %v819
        %916 = vmatpush2.msra.mxu0 %v818
        %917 = vmatprep.subr.mxu0 %v817
        %918 = vmatpush2.msra.mxu0 %v816
        %919 = vmatprep.subr.mxu0 %v815
        %920 = vmatpush2.msra.mxu0 %v814
        %921 = vmatprep.mubr.f32.mxu0 %v780
        %922 = vmatmul.mubr.f32.gmra.mxu0 %v779
        %v923 = vpop.f32.mrf.mxu0
        %v924 = vadd.f32 0.0, %v923
        %v925 = vpop.f32.mrf.mxu0
        %v926 = vadd.f32 0.0, %v925
        %927 = vdwg.mxu0
        %928 = vmatprep.subr.mxu0 0.0
        %929 = vmatpush1.msra.mxu0 0.0
        %930 = vmatprep.subr.mxu0 0.0
        %931 = vmatpush1.msra.mxu0 0.0
        %932 = vmatprep.subr.mxu0 0.0
        %933 = vmatpush1.msra.mxu0 0.0
        %934 = vmatprep.subr.mxu0 0.0
        %935 = vmatpush1.msra.mxu0 0.0
        %936 = vmatprep.subr.mxu0 0.0
        %937 = vmatpush1.msra.mxu0 0.0
        %938 = vmatprep.subr.mxu0 0.0
        %939 = vmatpush1.msra.mxu0 0.0
        %940 = vmatprep.subr.mxu0 0.0
        %941 = vmatpush1.msra.mxu0 0.0
        %942 = vmatprep.subr.mxu0 0.0
        %943 = vmatpush1.msra.mxu0 0.0
        %944 = vmatprep.subr.mxu0 0.0
        %945 = vmatpush1.msra.mxu0 0.0
        %946 = vmatprep.subr.mxu0 0.0
        %947 = vmatpush1.msra.mxu0 0.0
        %948 = vmatprep.subr.mxu0 0.0
        %949 = vmatpush1.msra.mxu0 0.0
        %950 = vmatprep.subr.mxu0 0.0
        %951 = vmatpush1.msra.mxu0 0.0
        %952 = vmatprep.subr.mxu0 %v853
        %953 = vmatpush1.msra.mxu0 %v852
        %954 = vmatprep.subr.mxu0 %v851
        %955 = vmatpush1.msra.mxu0 %v850
        %956 = vmatprep.subr.mxu0 %v849
        %957 = vmatpush1.msra.mxu0 %v848
        %958 = vmatprep.subr.mxu0 %v847
        %959 = vmatpush1.msra.mxu0 %v846
        %960 = vmatprep.subr.mxu0 0.0
        %961 = vmatpush2.msra.mxu0 0.0
        %962 = vmatprep.subr.mxu0 0.0
        %963 = vmatpush2.msra.mxu0 0.0
        %964 = vmatprep.subr.mxu0 0.0
        %965 = vmatpush2.msra.mxu0 0.0
        %966 = vmatprep.subr.mxu0 0.0
        %967 = vmatpush2.msra.mxu0 0.0
        %968 = vmatprep.subr.mxu0 0.0
        %969 = vmatpush2.msra.mxu0 0.0
        %970 = vmatprep.subr.mxu0 0.0
        %971 = vmatpush2.msra.mxu0 0.0
        %972 = vmatprep.subr.mxu0 0.0
        %973 = vmatpush2.msra.mxu0 0.0
        %974 = vmatprep.subr.mxu0 0.0
        %975 = vmatpush2.msra.mxu0 0.0
        %976 = vmatprep.subr.mxu0 0.0
        %977 = vmatpush2.msra.mxu0 0.0
        %978 = vmatprep.subr.mxu0 0.0
        %979 = vmatpush2.msra.mxu0 0.0
        %980 = vmatprep.subr.mxu0 0.0
        %981 = vmatpush2.msra.mxu0 0.0
        %982 = vmatprep.subr.mxu0 0.0
        %983 = vmatpush2.msra.mxu0 0.0
        %984 = vmatprep.subr.mxu0 0.0
        %985 = vmatpush2.msra.mxu0 0.0
        %986 = vmatprep.subr.mxu0 0.0
        %987 = vmatpush2.msra.mxu0 0.0
        %988 = vmatprep.subr.mxu0 0.0
        %989 = vmatpush2.msra.mxu0 0.0
        %990 = vmatprep.subr.mxu0 0.0
        %991 = vmatpush2.msra.mxu0 0.0
        %992 = vmatprep.mubr.f32.mxu0 0.0
        %993 = vmatmul.mubr.f32.gmra.mxu0 %v855
        %v994 = vpop.f32.mrf.mxu0
        %v995 = vadd.f32 %v924, %v994
        %v996 = vpop.f32.mrf.mxu0
        %v997 = vadd.f32 %v926, %v996
        %998 = vdwg.mxu0
        %1000 = vrot.lane.b32.xlu0 %v995, 64
        %v1001 = vpop.permute.xlu0 %1000
        %v1003 = vmax.f32 %v995, %v1001
        %v1004 = vmax.f32 %v1003, %v997
        %1006 = vrot.lane.b32.xlu0 %v997, 64
        %v1007 = vpop.permute.xlu0 %1006
        %v1009 = vmax.f32 %v1004, %v1007
        %vm1010 = vcmask 523264
        %1011 = vst.msk [vmem:[%s261] sm:$0xff] %vm1010, %v1009
        %s1012 = sand.u32 %s138, 1
        %s1013 = scalar_lea.sflag [#allocation6], %s1012
        %s1014 = sand.u32 %s138, 1
        %s1015 = smul.addr %s1014, 8
        %s1016 = scalar_lea.vmem [#allocation10], %s1015
        // Predicated region
        $region49: #{tpu_custom_call.1} parent=35 // pred_check
          %p1017 = pneg %p148
        $region50: #{tpu_custom_call.1} parent=35 // pred_check_branch
          %1019 = sbr.rel (%p1017) target = $region52
        $region51: #{tpu_custom_call.1} parent=35 // pred_region
          %s1021 = ssub.s32 128, 128
          %1022 = vsyncadd %s1013, %s1021
          %s1023 = sadd.s32 %s27, %s26
          %s1024 = smul.addr %s1023, 128
          %s1025 = scalar_lea.hbm %s4, %s1024
          %s1027 = sshll.u32 %s1016, 4
          %s1028 = int_to_ptr.vmem [resolvable:$true] %s1027
          %1030 = dma.vmem_to_hbm [thread:$0]  %s1028, 128, %s1025, %s1013
        $region52: #{tpu_custom_call.1} parent=35 // pred_fallthru
          _
      $region36: #{tpu_custom_call.1} parent=5 // pred_fallthru
        _
      %p1031 = scmp.le.s32.totalorder 2, %s17
      // Predicated region
      $region53: #{tpu_custom_call.1} parent=5 // pred_check
        %p1032 = pneg %p1031
      $region54: #{tpu_custom_call.1} parent=5 // pred_check_branch
        %1034 = sbr.rel (%p1032) target = $region56
      $region55: #{tpu_custom_call.1} parent=5 // pred_region
        %s1035 = ssub.s32 %s17, 2
        // Predicated region
        $region57: #{tpu_custom_call.1} parent=55 // pred_check
          %p1036 = pneg %p154
        $region58: #{tpu_custom_call.1} parent=55 // pred_check_branch
          %1038 = sbr.rel (%p1036) target = $region60
        $region59: #{tpu_custom_call.1} parent=55 // pred_region
          %s1039 = sand.u32 %s139, 1
          %s1040 = scalar_lea.sflag [#allocation6], %s1039
          %s1041 = sand.u32 %s139, 1
          %s1042 = smul.addr %s1041, 8
          %s1043 = scalar_lea.vmem [#allocation10], %s1042
          %1044 = dma.done %s1040, 128
        $region60: #{tpu_custom_call.1} parent=55 // pred_fallthru
          _
      $region56: #{tpu_custom_call.1} parent=5 // pred_fallthru
        _
    $region6: #{tpu_custom_call.1} parent=1 // loop_footer
      %s21 = sadd.s32 1, %s17
    $region7: #{tpu_custom_call.1} parent=1 // loop_footer_branch
      %16 = sbr.rel target = $region3
    $region8: #{tpu_custom_call.1} parent=1 // loop_exit
      _
    %1045 = vsyncpa [#allocation5], 1
    %s1046 = scalar_lea.sflag [#allocation5], 1
    %1047 = vsyncpa %s1046, 1
    %1048 = vsyncpa [#allocation8], 1
    %1049 = vsyncpa [#allocation6], 1
    %s1050 = scalar_lea.sflag [#allocation6], 1
    %1051 = vsyncpa %s1050, 1

</llo_original>
